<compile_context>
chip_gen: v7x
topology: tpu7x:2x2x1
jax: 0.10.0
libtpu: 0.0.40
codegen_flags: <defaults>
</compile_context>

<pallas_src>
import jax
import jax.numpy as jnp
from jax.experimental import pallas as pl
from jax.experimental.pallas import tpu as pltpu


def gate_kernel(x_ref, y_ref, wgx_ref, wgy_ref, wfx_ref, wfy_ref,
                bg_ref, bf_ref, o_ref):
    # x_ref, y_ref : (TILE, W)      activations (f32 in HBM)
    # w??_ref      : (W, W)         weight blocks (f32, or bf16 at large H)
    # bg/bf_ref    : (1, W)         biases (f32)
    # o_ref        : (TILE, W)
    cdt = wgx_ref.dtype
    x = x_ref[...].astype(cdt)
    y = y_ref[...].astype(cdt)
    lin_g = (jnp.dot(x, wgx_ref[...], preferred_element_type=jnp.float32)
             + jnp.dot(y, wgy_ref[...], preferred_element_type=jnp.float32)
             + bg_ref[...])
    lin_f = (jnp.dot(x, wfx_ref[...], preferred_element_type=jnp.float32)
             + jnp.dot(y, wfy_ref[...], preferred_element_type=jnp.float32)
             + bf_ref[...])
    o_ref[...] = (jax.nn.sigmoid(lin_g) * jnp.tanh(lin_f)).astype(o_ref.dtype)


def _vmem_capacity_bytes():
    try:
        return int(pltpu.get_tpu_info().vmem_capacity_bytes)
    except Exception:
        return 64 * 1024 * 1024   # conservative: v7x per-TC physical VMEM


def _choose_tile_rows(num_rows, row_width, w_k, w_n, w_itemsize):
    """Row tile under a generation-aware VMEM budget (~24 MiB v7x, ~48 MiB v5e/v6e)."""
    cap = _vmem_capacity_bytes()
    budget = (cap * 3) // 8
    # Weights are double-buffer-reserved by the default pipeline (constant
    # index_map -> single DMA, but memory is reserved twice); biases are tiny.
    fixed = 2 * 4 * w_k * w_n * w_itemsize + 2 * 2 * w_n * 4
    # Per kernel-row: x, y, out tiles double-buffered (f32) + lin_g/lin_f/act temps.
    per_row = 2 * 3 * row_width * 4 + 4 * row_width * 4
    t = max(8, (budget - fixed) // per_row)
    t = min(t, 8192, num_rows)            # cap raised from 2048 per review
    if t < num_rows:
        t = max(8, (t // 8) * 8)          # (8, 128) sublane rule for partial tiles
    # Prefer >= 2 grid steps so v7x's two TensorCores both get work on the
    # "parallel" M axis (a 1-step grid leaves one core idle).
    if t == num_rows and num_rows > 8:
        t = max(8, (((num_rows + 1) // 2 + 7) // 8) * 8)
    return int(t)


def gate_forward(x, y, wg, bg, wf, bf, *, tile_rows=None, matmul_dtype=None):
    """x, y: (B, S, H) f32.  wg, wf: (2H, H) (transposed vs PyTorch).  bg, bf: (H,)."""
    B, S, H = x.shape
    M = B * S

    if matmul_dtype is None:
        # bf16 MXU operands only in the compute-bound regime; f32 at small H.
        matmul_dtype = jnp.bfloat16 if H >= 256 else jnp.float32
    w_itemsize = jnp.dtype(matmul_dtype).itemsize

    # ---- wrapper-side weight prep (tiny, one-time) ----
    wgx, wgy = wg[:H], wg[H:]             # (H, H) x-half / y-half of Linear_g
    wfx, wfy = wf[:H], wf[H:]             # (H, H) x-half / y-half of Linear_f

    x2 = x.reshape(M, H)
    y2 = y.reshape(M, H)

    pack = (H < 128) and (128 % H == 0)
    if pack:
        # Lane-dense packing: R logical rows per 128-lane kernel row.
        R = 128 // H
        M_pad = ((M + R - 1) // R) * R
        if M_pad != M:
            x2 = jnp.pad(x2, ((0, M_pad - M), (0, 0)))
            y2 = jnp.pad(y2, ((0, M_pad - M), (0, 0)))
        rows, width = M_pad // R, 128
        x2 = x2.reshape(rows, width)       # contiguous -> free reshape
        y2 = y2.reshape(rows, width)
        eye = jnp.eye(R, dtype=wg.dtype)
        wgx = jnp.kron(eye, wgx)           # (128, 128) block-diagonal
        wgy = jnp.kron(eye, wgy)
        wfx = jnp.kron(eye, wfx)
        wfy = jnp.kron(eye, wfy)
        bg2 = jnp.tile(bg, R).reshape(1, width)
        bf2 = jnp.tile(bf, R).reshape(1, width)
    else:
        rows, width, M_pad = M, H, M
        bg2 = bg.reshape(1, width)
        bf2 = bf.reshape(1, width)

    wgx = wgx.astype(matmul_dtype)
    wgy = wgy.astype(matmul_dtype)
    wfx = wfx.astype(matmul_dtype)
    wfy = wfy.astype(matmul_dtype)
    w_k = wgx.shape[0]

    if tile_rows is None:
        tile_rows = _choose_tile_rows(rows, width, w_k, width, w_itemsize)
    tile_rows = int(min(tile_rows, rows))
    if tile_rows < rows:
        tile_rows = max(8, (tile_rows // 8) * 8)
        tile_rows = min(tile_rows, rows)

    grid = (pl.cdiv(rows, tile_rows),)

    cap = _vmem_capacity_bytes()
    vmem_limit = int(min((cap * 3) // 4, 96 * 1024 * 1024))   # ~48 MiB v7x, ~96 MiB v5e/v6e

    cost = pl.CostEstimate(
        flops=8 * M * H * H,
        transcendentals=3 * M * H,
        bytes_accessed=12 * M * H + w_itemsize * 4 * w_k * width + 8 * width,
    )

    out = pl.pallas_call(
        gate_kernel,
        out_shape=jax.ShapeDtypeStruct((rows, width), x.dtype),
        grid_spec=pl.GridSpec(
            grid=grid,
            in_specs=[
                pl.BlockSpec((tile_rows, width), lambda i: (i, 0)),   # x (streamed)
                pl.BlockSpec((tile_rows, width), lambda i: (i, 0)),   # y (streamed)
                pl.BlockSpec((w_k, width), lambda i: (0, 0)),         # Wgx (resident)
                pl.BlockSpec((w_k, width), lambda i: (0, 0)),         # Wgy (resident)
                pl.BlockSpec((w_k, width), lambda i: (0, 0)),         # Wfx (resident)
                pl.BlockSpec((w_k, width), lambda i: (0, 0)),         # Wfy (resident)
                pl.BlockSpec((1, width), lambda i: (0, 0)),           # bg  (resident)
                pl.BlockSpec((1, width), lambda i: (0, 0)),           # bf  (resident)
            ],
            out_specs=pl.BlockSpec((tile_rows, width), lambda i: (i, 0)),
        ),
        compiler_params=pltpu.CompilerParams(
            dimension_semantics=("parallel",),   # let v7x shard M over its 2 TCs
            vmem_limit_bytes=vmem_limit,
        ),
        cost_estimate=cost,
    )(x2, y2, wgx, wgy, wfx, wfy, bg2, bf2)

    if pack:
        out = out.reshape(M_pad, H)
        if M_pad != M:
            out = out[:M]
    return out.reshape(B, S, H)


def reference_forward(x, y, wg, bg, wf, bf):
    z = jnp.concatenate([x, y], axis=2)
    gate = jax.nn.sigmoid(jnp.einsum("bsk,kn->bsn", z, wg) + bg)
    f = jnp.tanh(jnp.einsum("bsk,kn->bsn", z, wf) + bf)
    return gate * f


def _make_params(key, H):
    kwg, kbg, kwf, kbf = jax.random.split(key, 4)
    bound = 1.0 / jnp.sqrt(2.0 * H)
    # nn.Linear(2H, H): weight (H, 2H), bias (H,). Stored transposed: (2H, H).
    wg = jax.random.uniform(kwg, (2 * H, H), minval=-bound, maxval=bound, dtype=jnp.float32)
    bg = jax.random.uniform(kbg, (H,), minval=-bound, maxval=bound, dtype=jnp.float32)
    wf = jax.random.uniform(kwf, (2 * H, H), minval=-bound, maxval=bound, dtype=jnp.float32)
    bf = jax.random.uniform(kbf, (H,), minval=-bound, maxval=bound, dtype=jnp.float32)
    return wg, bg, wf, bf


if __name__ == "__main__":
    key = jax.random.PRNGKey(0)
    kp, k1, k2, k3, k4, k5, k6, k7, k8, kp2 = jax.random.split(key, 10)

    # --- Test 1: module-implied small shape, lane-dense packed path (H=32) ---
    H = 32
    wg, bg, wf, bf = _make_params(kp, H)
    B, S = 2, 8
    x = jax.random.normal(k1, (B, S, H), dtype=jnp.float32)
    y = jax.random.normal(k2, (B, S, H), dtype=jnp.float32)
    out = jax.block_until_ready(gate_forward(x, y, wg, bg, wf, bf))
    ref = reference_forward(x, y, wg, bg, wf, bf)
    assert out.shape == (B, S, H)
    assert jnp.allclose(out, ref, atol=1e-4, rtol=1e-4)

    # --- Test 2: multi-tile packed path with ragged last block ---
    B2, S2 = 2, 200                       # M=400 -> 100 packed rows; tile 32 -> grid of 4
    x2 = jax.random.normal(k3, (B2, S2, H), dtype=jnp.float32)
    y2 = jax.random.normal(k4, (B2, S2, H), dtype=jnp.float32)
    out2 = jax.block_until_ready(gate_forward(x2, y2, wg, bg, wf, bf, tile_rows=32))
    ref2 = reference_forward(x2, y2, wg, bg, wf, bf)
    assert out2.shape == (B2, S2, H)
    assert jnp.allclose(out2, ref2, atol=1e-4, rtol=1e-4)

    # --- Test 3: M not divisible by the packing factor (padding path) ---
    x3 = jax.random.normal(k5, (1, 7, H), dtype=jnp.float32)
    y3 = jax.random.normal(k6, (1, 7, H), dtype=jnp.float32)
    out3 = jax.block_until_ready(gate_forward(x3, y3, wg, bg, wf, bf))
    ref3 = reference_forward(x3, y3, wg, bg, wf, bf)
    assert out3.shape == (1, 7, H)
    assert jnp.allclose(out3, ref3, atol=1e-4, rtol=1e-4)

    # --- Test 4: non-packable H exercises the generic (unpacked) path ---
    H4 = 48
    wg4, bg4, wf4, bf4 = _make_params(kp2, H4)
    x4 = jax.random.normal(k7, (2, 24, H4), dtype=jnp.float32)
    y4 = jax.random.normal(k8, (2, 24, H4), dtype=jnp.float32)
    out4 = jax.block_until_ready(gate_forward(x4, y4, wg4, bg4, wf4, bf4))
    ref4 = reference_forward(x4, y4, wg4, bg4, wf4, bf4)
    assert out4.shape == (2, 24, H4)
    assert jnp.allclose(out4, ref4, atol=1e-4, rtol=1e-4)

    print("KERNEL_OK")
</pallas_src>

<mosaic_0001>
module attributes {stable_mosaic.version = 11 : i64} {
  func.func @gate_kernel(%arg0: i32, %arg1: memref<4x128xf32, #tpu.memory_space<vmem>>, %arg2: memref<4x128xf32, #tpu.memory_space<vmem>>, %arg3: memref<128x128xf32, #tpu.memory_space<vmem>>, %arg4: memref<128x128xf32, #tpu.memory_space<vmem>>, %arg5: memref<128x128xf32, #tpu.memory_space<vmem>>, %arg6: memref<128x128xf32, #tpu.memory_space<vmem>>, %arg7: memref<1x128xf32, #tpu.memory_space<vmem>>, %arg8: memref<1x128xf32, #tpu.memory_space<vmem>>, %arg9: memref<4x128xf32, #tpu.memory_space<vmem>>) attributes {dimension_semantics = [#tpu.dimension_semantics<parallel>], iteration_bounds = array<i64: 1>, scalar_prefetch = 0 : i64, scratch_operands = 0 : i64, tpu.core_type = #tpu.core_type<tc>, window_params = [{transform_indices = @transform_0, window_bounds = array<i64: 4, 128>}, {transform_indices = @transform_1, window_bounds = array<i64: 4, 128>}, {pipeline_mode = #tpu.pipeline_mode<synchronous>, transform_indices = @transform_2, window_bounds = array<i64: 128, 128>}, {pipeline_mode = #tpu.pipeline_mode<synchronous>, transform_indices = @transform_3, window_bounds = array<i64: 128, 128>}, {pipeline_mode = #tpu.pipeline_mode<synchronous>, transform_indices = @transform_4, window_bounds = array<i64: 128, 128>}, {pipeline_mode = #tpu.pipeline_mode<synchronous>, transform_indices = @transform_5, window_bounds = array<i64: 128, 128>}, {pipeline_mode = #tpu.pipeline_mode<synchronous>, transform_indices = @transform_6, window_bounds = array<i64: 1, 128>}, {pipeline_mode = #tpu.pipeline_mode<synchronous>, transform_indices = @transform_7, window_bounds = array<i64: 1, 128>}, {transform_indices = @transform_8, window_bounds = array<i64: 4, 128>}]} {
    %c0 = arith.constant 0 : index
    %c0_0 = arith.constant 0 : index
    %0 = vector.load %arg1[%c0, %c0_0] : memref<4x128xf32, #tpu.memory_space<vmem>>, vector<4x128xf32>
    %c0_1 = arith.constant 0 : index
    %c0_2 = arith.constant 0 : index
    %1 = vector.load %arg2[%c0_1, %c0_2] : memref<4x128xf32, #tpu.memory_space<vmem>>, vector<4x128xf32>
    %c0_3 = arith.constant 0 : index
    %c0_4 = arith.constant 0 : index
    %2 = vector.load %arg3[%c0_3, %c0_4] : memref<128x128xf32, #tpu.memory_space<vmem>>, vector<128x128xf32>
    %cst = arith.constant dense<0.000000e+00> : vector<4x128xf32>
    %3 = tpu.matmul %0, %2, %cst {dimension_numbers = #tpu.dot_dimension_numbers<[1], [0], [0], [1], [0, 0, 1, 1], [], []>} : vector<4x128xf32>, vector<128x128xf32>, vector<4x128xf32> -> vector<4x128xf32>
    %c0_5 = arith.constant 0 : index
    %c0_6 = arith.constant 0 : index
    %4 = vector.load %arg4[%c0_5, %c0_6] : memref<128x128xf32, #tpu.memory_space<vmem>>, vector<128x128xf32>
    %cst_7 = arith.constant dense<0.000000e+00> : vector<4x128xf32>
    %5 = tpu.matmul %1, %4, %cst_7 {dimension_numbers = #tpu.dot_dimension_numbers<[1], [0], [0], [1], [0, 0, 1, 1], [], []>} : vector<4x128xf32>, vector<128x128xf32>, vector<4x128xf32> -> vector<4x128xf32>
    %6 = arith.addf %3, %5 : vector<4x128xf32>
    %c0_8 = arith.constant 0 : index
    %c0_9 = arith.constant 0 : index
    %7 = vector.load %arg7[%c0_8, %c0_9] : memref<1x128xf32, #tpu.memory_space<vmem>>, vector<1x128xf32>
    %8 = vector.broadcast %7 : vector<1x128xf32> to vector<4x128xf32>
    %9 = arith.addf %6, %8 : vector<4x128xf32>
    %c0_10 = arith.constant 0 : index
    %c0_11 = arith.constant 0 : index
    %10 = vector.load %arg5[%c0_10, %c0_11] : memref<128x128xf32, #tpu.memory_space<vmem>>, vector<128x128xf32>
    %cst_12 = arith.constant dense<0.000000e+00> : vector<4x128xf32>
    %11 = tpu.matmul %0, %10, %cst_12 {dimension_numbers = #tpu.dot_dimension_numbers<[1], [0], [0], [1], [0, 0, 1, 1], [], []>} : vector<4x128xf32>, vector<128x128xf32>, vector<4x128xf32> -> vector<4x128xf32>
    %c0_13 = arith.constant 0 : index
    %c0_14 = arith.constant 0 : index
    %12 = vector.load %arg6[%c0_13, %c0_14] : memref<128x128xf32, #tpu.memory_space<vmem>>, vector<128x128xf32>
    %cst_15 = arith.constant dense<0.000000e+00> : vector<4x128xf32>
    %13 = tpu.matmul %1, %12, %cst_15 {dimension_numbers = #tpu.dot_dimension_numbers<[1], [0], [0], [1], [0, 0, 1, 1], [], []>} : vector<4x128xf32>, vector<128x128xf32>, vector<4x128xf32> -> vector<4x128xf32>
    %14 = arith.addf %11, %13 : vector<4x128xf32>
    %c0_16 = arith.constant 0 : index
    %c0_17 = arith.constant 0 : index
    %15 = vector.load %arg8[%c0_16, %c0_17] : memref<1x128xf32, #tpu.memory_space<vmem>>, vector<1x128xf32>
    %16 = vector.broadcast %15 : vector<1x128xf32> to vector<4x128xf32>
    %17 = arith.addf %14, %16 : vector<4x128xf32>
    %18 = arith.negf %9 : vector<4x128xf32>
    %19 = math.exp %18 : vector<4x128xf32>
    %cst_18 = arith.constant 1.000000e+00 : f32
    %20 = vector.broadcast %cst_18 : f32 to vector<4x128xf32>
    %21 = arith.addf %20, %19 : vector<4x128xf32>
    %22 = arith.divf %20, %21 : vector<4x128xf32>
    %23 = math.tanh %17 : vector<4x128xf32>
    %24 = arith.mulf %22, %23 : vector<4x128xf32>
    %c0_19 = arith.constant 0 : index
    %c0_20 = arith.constant 0 : index
    %25 = vector.load %arg9[%c0_19, %c0_20] : memref<4x128xf32, #tpu.memory_space<vmem>>, vector<4x128xf32>
    tpu.vector_store %arg9[%c0_19, %c0_20], %24 {strides = array<i32>} : memref<4x128xf32, #tpu.memory_space<vmem>>, vector<4x128xf32>,
    return
  }
  func.func @transform_0(%arg0: i32) -> (i32, i32) {
    %c0_i32 = arith.constant 0 : i32
    %c0_i32_0 = arith.constant 0 : i32
    return %arg0, %c0_i32 : i32, i32
  }
  func.func @transform_1(%arg0: i32) -> (i32, i32) {
    %c0_i32 = arith.constant 0 : i32
    %c0_i32_0 = arith.constant 0 : i32
    return %arg0, %c0_i32 : i32, i32
  }
  func.func @transform_2(%arg0: i32) -> (i32, i32) {
    %c0_i32 = arith.constant 0 : i32
    %c0_i32_0 = arith.constant 0 : i32
    %c0_i32_1 = arith.constant 0 : i32
    return %c0_i32, %c0_i32_0 : i32, i32
  }
  func.func @transform_3(%arg0: i32) -> (i32, i32) {
    %c0_i32 = arith.constant 0 : i32
    %c0_i32_0 = arith.constant 0 : i32
    %c0_i32_1 = arith.constant 0 : i32
    return %c0_i32, %c0_i32_0 : i32, i32
  }
  func.func @transform_4(%arg0: i32) -> (i32, i32) {
    %c0_i32 = arith.constant 0 : i32
    %c0_i32_0 = arith.constant 0 : i32
    %c0_i32_1 = arith.constant 0 : i32
    return %c0_i32, %c0_i32_0 : i32, i32
  }
  func.func @transform_5(%arg0: i32) -> (i32, i32) {
    %c0_i32 = arith.constant 0 : i32
    %c0_i32_0 = arith.constant 0 : i32
    %c0_i32_1 = arith.constant 0 : i32
    return %c0_i32, %c0_i32_0 : i32, i32
  }
  func.func @transform_6(%arg0: i32) -> (i32, i32) {
    %c0_i32 = arith.constant 0 : i32
    %c0_i32_0 = arith.constant 0 : i32
    %c0_i32_1 = arith.constant 0 : i32
    return %c0_i32, %c0_i32_0 : i32, i32
  }
  func.func @transform_7(%arg0: i32) -> (i32, i32) {
    %c0_i32 = arith.constant 0 : i32
    %c0_i32_0 = arith.constant 0 : i32
    %c0_i32_1 = arith.constant 0 : i32
    return %c0_i32, %c0_i32_0 : i32, i32
  }
  func.func @transform_8(%arg0: i32) -> (i32, i32) {
    %c0_i32 = arith.constant 0 : i32
    %c0_i32_0 = arith.constant 0 : i32
    return %arg0, %c0_i32 : i32, i32
  }
}

</mosaic_0001>

<llo_original>
// kernel: tpu_custom_call.1
$region0: #{tpu_custom_call.1}
  #allocation0 [shape = 'u32[]', space=smem, size = 0x4, offset = 0x4, fixed_abs, tag = 'smem constant byte address 0x4 - core index']
  #allocation1 [shape = 'u32[144,128]{1,0:T(1,128)}', space=vmem, size = 0x12000, scoped, tag = 'internal scratch']
  %s0 = inlined_call_operand.hbm [shape: f32[4,128], index: 0, kind: input, shape index: {}]
  %s1 = inlined_call_operand.hbm [shape: f32[4,128], index: 1, kind: input, shape index: {}]
  %s2 = inlined_call_operand.hbm [shape: f32[128,128], index: 2, kind: input, shape index: {}]
  %s3 = inlined_call_operand.hbm [shape: f32[128,128], index: 3, kind: input, shape index: {}]
  %s4 = inlined_call_operand.hbm [shape: f32[128,128], index: 4, kind: input, shape index: {}]
  %s5 = inlined_call_operand.hbm [shape: f32[128,128], index: 5, kind: input, shape index: {}]
  %s6 = inlined_call_operand.vmem [shape: f32[1,128], index: 6, kind: input, shape index: {}]
  %s7 = inlined_call_operand.vmem [shape: f32[1,128], index: 7, kind: input, shape index: {}]
  %s8 = inlined_call_operand.hbm [shape: f32[4,128], index: 8, kind: output, shape index: {}]
  %s9 = sld [smem:[#allocation0]]
  $region66: #{tpu_custom_call.1} parent=0
    _
  %s11 = ssub.s32 1, %s9
  %s12 = scalar_select 0, %s11, %s9
  $region1: #{tpu_custom_call.1} parent=0
    #allocation2 [shape = 'u8[2048]{0}', space=vmem, size = 0x800, scoped, tag = 'input window, operand 0, single buffered']
    #allocation3 [shape = 's32[1]{0}', space=sflag, size = 0x4, scoped, tag = 'scoped memory for tpu_custom_call.1']
    #allocation4 [shape = 's32[1]{0}', space=sflag, size = 0x4, scoped, tag = 'scoped memory for tpu_custom_call.1']
    #allocation5 [shape = 'u8[2048]{0}', space=vmem, size = 0x800, scoped, tag = 'input window, operand 1, single buffered']
    #allocation6 [shape = 's32[1]{0}', space=sflag, size = 0x4, scoped, tag = 'scoped memory for tpu_custom_call.1']
    #allocation7 [shape = 'u8[65536]{0}', space=vmem, size = 0x10000, scoped, tag = 'input window, operand 2, single buffered']
    #allocation8 [shape = 'u8[65536]{0}', space=vmem, size = 0x10000, scoped, tag = 'input window, operand 3, single buffered']
    #allocation9 [shape = 's32[1]{0}', space=sflag, size = 0x4, scoped, tag = 'scoped memory for tpu_custom_call.1']
    #allocation10 [shape = 'u8[65536]{0}', space=vmem, size = 0x10000, scoped, tag = 'input window, operand 4, single buffered']
    #allocation11 [shape = 'u8[65536]{0}', space=vmem, size = 0x10000, scoped, tag = 'input window, operand 5, single buffered']
    #allocation12 [shape = 's32[1]{0}', space=sflag, size = 0x4, scoped, tag = 'scoped memory for tpu_custom_call.1']
    #allocation13 [shape = 'u8[2048]{0}', space=vmem, size = 0x800, scoped, tag = 'output window, operand 0, single buffered']
    %13 = vsyncpa [#allocation3], 0
    %14 = vsyncpa [#allocation6], 0
    %15 = vsyncpa [#allocation9], 0
    %16 = vsyncpa [#allocation12], 0
    %17 = vsyncpa [#allocation4], 0
    // Predicated region
    $region2: #{tpu_custom_call.1} parent=1 // pred_check
      _
    $region3: #{tpu_custom_call.1} parent=1 // pred_check_branch
      %19 = sbr.rel (0) target = $region5
    $region4: #{tpu_custom_call.1} parent=1 // pred_region
      %s21 = ssub.s32 64, 64
      %22 = vsyncadd [#allocation3], %s21
      %s24 = sshll.u32 [#allocation2], 4
      %s25 = int_to_ptr.vmem [resolvable:$true] %s24
      %27 = dma.hbm_to_vmem [thread:$0]  %s0, 64, %s25, [#allocation3]
    $region5: #{tpu_custom_call.1} parent=1 // pred_fallthru
      _
    // Predicated region
    $region6: #{tpu_custom_call.1} parent=1 // pred_check
      _
    $region7: #{tpu_custom_call.1} parent=1 // pred_check_branch
      %29 = sbr.rel (0) target = $region9
    $region8: #{tpu_custom_call.1} parent=1 // pred_region
      %s31 = ssub.s32 64, 64
      %32 = vsyncadd [#allocation6], %s31
      %s34 = sshll.u32 [#allocation5], 4
      %s35 = int_to_ptr.vmem [resolvable:$true] %s34
      %37 = dma.hbm_to_vmem [thread:$0]  %s1, 64, %s35, [#allocation6]
    $region9: #{tpu_custom_call.1} parent=1 // pred_fallthru
      _
    // Predicated region
    $region10: #{tpu_custom_call.1} parent=1 // pred_check
      _
    $region11: #{tpu_custom_call.1} parent=1 // pred_check_branch
      %39 = sbr.rel (0) target = $region13
    $region12: #{tpu_custom_call.1} parent=1 // pred_region
      %s41 = ssub.s32 2048, 2048
      %42 = vsyncadd [#allocation6], %s41
      %s43 = sshll.u32 [#allocation7], 4
      %s44 = int_to_ptr.vmem [resolvable:$true] %s43
      %49 = dma.hbm_to_vmem [thread:$0]  %s2, 2048, %s44, [#allocation6], 128, 128, 8
    $region13: #{tpu_custom_call.1} parent=1 // pred_fallthru
      _
    // Predicated region
    $region14: #{tpu_custom_call.1} parent=1 // pred_check
      _
    $region15: #{tpu_custom_call.1} parent=1 // pred_check_branch
      %51 = sbr.rel (0) target = $region17
    $region16: #{tpu_custom_call.1} parent=1 // pred_region
      %s53 = ssub.s32 2048, 2048
      %54 = vsyncadd [#allocation9], %s53
      %s55 = sshll.u32 [#allocation8], 4
      %s56 = int_to_ptr.vmem [resolvable:$true] %s55
      %61 = dma.hbm_to_vmem [thread:$0]  %s3, 2048, %s56, [#allocation9], 128, 128, 8
    $region17: #{tpu_custom_call.1} parent=1 // pred_fallthru
      _
    // Predicated region
    $region18: #{tpu_custom_call.1} parent=1 // pred_check
      _
    $region19: #{tpu_custom_call.1} parent=1 // pred_check_branch
      %63 = sbr.rel (0) target = $region21
    $region20: #{tpu_custom_call.1} parent=1 // pred_region
      %s65 = ssub.s32 2048, 2048
      %66 = vsyncadd [#allocation9], %s65
      %s67 = sshll.u32 [#allocation10], 4
      %s68 = int_to_ptr.vmem [resolvable:$true] %s67
      %73 = dma.hbm_to_vmem [thread:$0]  %s4, 2048, %s68, [#allocation9], 128, 128, 8
    $region21: #{tpu_custom_call.1} parent=1 // pred_fallthru
      _
    // Predicated region
    $region22: #{tpu_custom_call.1} parent=1 // pred_check
      _
    $region23: #{tpu_custom_call.1} parent=1 // pred_check_branch
      %75 = sbr.rel (0) target = $region25
    $region24: #{tpu_custom_call.1} parent=1 // pred_region
      %s77 = ssub.s32 2048, 2048
      %78 = vsyncadd [#allocation12], %s77
      %s79 = sshll.u32 [#allocation11], 4
      %s80 = int_to_ptr.vmem [resolvable:$true] %s79
      %85 = dma.hbm_to_vmem [thread:$0]  %s5, 2048, %s80, [#allocation12], 128, 128, 8
    $region25: #{tpu_custom_call.1} parent=1 // pred_fallthru
      _
    // Predicated region
    $region26: #{tpu_custom_call.1} parent=1 // pred_check
      _
    $region27: #{tpu_custom_call.1} parent=1 // pred_check_branch
      %87 = sbr.rel (0) target = $region29
    $region28: #{tpu_custom_call.1} parent=1 // pred_region
      _
    $region29: #{tpu_custom_call.1} parent=1 // pred_fallthru
      _
    // Predicated region
    $region30: #{tpu_custom_call.1} parent=1 // pred_check
      _
    $region31: #{tpu_custom_call.1} parent=1 // pred_check_branch
      %89 = sbr.rel (0) target = $region33
    $region32: #{tpu_custom_call.1} parent=1 // pred_region
      _
    $region33: #{tpu_custom_call.1} parent=1 // pred_fallthru
      _
    // Predicated region
    $region34: #{tpu_custom_call.1} parent=1 // pred_check
      _
    $region35: #{tpu_custom_call.1} parent=1 // pred_check_branch
      %91 = sbr.rel (0) target = $region37
    $region36: #{tpu_custom_call.1} parent=1 // pred_region
      %92 = dma.done [#allocation3], 64
    $region37: #{tpu_custom_call.1} parent=1 // pred_fallthru
      _
    // Predicated region
    $region38: #{tpu_custom_call.1} parent=1 // pred_check
      _
    $region39: #{tpu_custom_call.1} parent=1 // pred_check_branch
      %94 = sbr.rel (0) target = $region41
    $region40: #{tpu_custom_call.1} parent=1 // pred_region
      %95 = dma.done [#allocation6], 64
    $region41: #{tpu_custom_call.1} parent=1 // pred_fallthru
      _
    // Predicated region
    $region42: #{tpu_custom_call.1} parent=1 // pred_check
      _
    $region43: #{tpu_custom_call.1} parent=1 // pred_check_branch
      %97 = sbr.rel (0) target = $region45
    $region44: #{tpu_custom_call.1} parent=1 // pred_region
      %98 = dma.done [#allocation6], 2048
    $region45: #{tpu_custom_call.1} parent=1 // pred_fallthru
      _
    // Predicated region
    $region46: #{tpu_custom_call.1} parent=1 // pred_check
      _
    $region47: #{tpu_custom_call.1} parent=1 // pred_check_branch
      %100 = sbr.rel (0) target = $region49
    $region48: #{tpu_custom_call.1} parent=1 // pred_region
      %101 = dma.done [#allocation9], 2048
    $region49: #{tpu_custom_call.1} parent=1 // pred_fallthru
      _
    // Predicated region
    $region50: #{tpu_custom_call.1} parent=1 // pred_check
      _
    $region51: #{tpu_custom_call.1} parent=1 // pred_check_branch
      %103 = sbr.rel (0) target = $region53
    $region52: #{tpu_custom_call.1} parent=1 // pred_region
      %104 = dma.done [#allocation9], 2048
    $region53: #{tpu_custom_call.1} parent=1 // pred_fallthru
      _
    // Predicated region
    $region54: #{tpu_custom_call.1} parent=1 // pred_check
      _
    $region55: #{tpu_custom_call.1} parent=1 // pred_check_branch
      %106 = sbr.rel (0) target = $region57
    $region56: #{tpu_custom_call.1} parent=1 // pred_region
      %107 = dma.done [#allocation12], 2048
    $region57: #{tpu_custom_call.1} parent=1 // pred_fallthru
      _
    %v108 = vld [vmem:[#allocation2] sm:$0xf]
    %v109 = vld [vmem:[#allocation5] sm:$0xf]
    %v110 = vld [vmem:[#allocation7] sm:$0xff]
    %v111 = vld [vmem:[#allocation7 + $0x8] sm:$0xff]
    %v112 = vld [vmem:[#allocation7 + $0x10] sm:$0xff]
    %v113 = vld [vmem:[#allocation7 + $0x18] sm:$0xff]
    %v114 = vld [vmem:[#allocation7 + $0x20] sm:$0xff]
    %v115 = vld [vmem:[#allocation7 + $0x28] sm:$0xff]
    %v116 = vld [vmem:[#allocation7 + $0x30] sm:$0xff]
    %v117 = vld [vmem:[#allocation7 + $0x38] sm:$0xff]
    %v118 = vld [vmem:[#allocation7 + $0x40] sm:$0xff]
    %v119 = vld [vmem:[#allocation7 + $0x48] sm:$0xff]
    %v120 = vld [vmem:[#allocation7 + $0x50] sm:$0xff]
    %v121 = vld [vmem:[#allocation7 + $0x58] sm:$0xff]
    %v122 = vld [vmem:[#allocation7 + $0x60] sm:$0xff]
    %v123 = vld [vmem:[#allocation7 + $0x68] sm:$0xff]
    %v124 = vld [vmem:[#allocation7 + $0x70] sm:$0xff]
    %v125 = vld [vmem:[#allocation7 + $0x78] sm:$0xff]
    %v126 = vld [vmem:[#allocation8] sm:$0xff]
    %v127 = vld [vmem:[#allocation8 + $0x8] sm:$0xff]
    %v128 = vld [vmem:[#allocation8 + $0x10] sm:$0xff]
    %v129 = vld [vmem:[#allocation8 + $0x18] sm:$0xff]
    %v130 = vld [vmem:[#allocation8 + $0x20] sm:$0xff]
    %v131 = vld [vmem:[#allocation8 + $0x28] sm:$0xff]
    %v132 = vld [vmem:[#allocation8 + $0x30] sm:$0xff]
    %v133 = vld [vmem:[#allocation8 + $0x38] sm:$0xff]
    %v134 = vld [vmem:[#allocation8 + $0x40] sm:$0xff]
    %v135 = vld [vmem:[#allocation8 + $0x48] sm:$0xff]
    %v136 = vld [vmem:[#allocation8 + $0x50] sm:$0xff]
    %v137 = vld [vmem:[#allocation8 + $0x58] sm:$0xff]
    %v138 = vld [vmem:[#allocation8 + $0x60] sm:$0xff]
    %v139 = vld [vmem:[#allocation8 + $0x68] sm:$0xff]
    %v140 = vld [vmem:[#allocation8 + $0x70] sm:$0xff]
    %v141 = vld [vmem:[#allocation8 + $0x78] sm:$0xff]
    %142 = vmatprep.subr.mxu0 0.0
    %143 = vmatpush1.msra.mxu0 %v126
    %144 = vmatprep.subr.mxu0 0.0
    %145 = vmatpush1.msra.mxu0 %v127
    %146 = vmatprep.subr.mxu0 0.0
    %147 = vmatpush1.msra.mxu0 %v128
    %148 = vmatprep.subr.mxu0 0.0
    %149 = vmatpush1.msra.mxu0 %v129
    %150 = vmatprep.subr.mxu0 0.0
    %151 = vmatpush1.msra.mxu0 %v130
    %152 = vmatprep.subr.mxu0 0.0
    %153 = vmatpush1.msra.mxu0 %v131
    %154 = vmatprep.subr.mxu0 0.0
    %155 = vmatpush1.msra.mxu0 %v132
    %156 = vmatprep.subr.mxu0 0.0
    %157 = vmatpush1.msra.mxu0 %v133
    %158 = vmatprep.subr.mxu0 0.0
    %159 = vmatpush1.msra.mxu0 %v134
    %160 = vmatprep.subr.mxu0 0.0
    %161 = vmatpush1.msra.mxu0 %v135
    %162 = vmatprep.subr.mxu0 0.0
    %163 = vmatpush1.msra.mxu0 %v136
    %164 = vmatprep.subr.mxu0 0.0
    %165 = vmatpush1.msra.mxu0 %v137
    %166 = vmatprep.subr.mxu0 0.0
    %167 = vmatpush1.msra.mxu0 %v138
    %168 = vmatprep.subr.mxu0 0.0
    %169 = vmatpush1.msra.mxu0 %v139
    %170 = vmatprep.subr.mxu0 0.0
    %171 = vmatpush1.msra.mxu0 %v140
    %172 = vmatprep.subr.mxu0 0.0
    %173 = vmatpush1.msra.mxu0 %v141
    %174 = vmatprep.subr.mxu0 0.0
    %175 = vmatpush1.msra.mxu0 0.0
    %176 = vmatprep.subr.mxu0 0.0
    %177 = vmatpush1.msra.mxu0 0.0
    %178 = vmatprep.subr.mxu0 0.0
    %179 = vmatpush1.msra.mxu0 0.0
    %180 = vmatprep.subr.mxu0 0.0
    %181 = vmatpush1.msra.mxu0 0.0
    %182 = vmatprep.subr.mxu0 0.0
    %183 = vmatpush1.msra.mxu0 0.0
    %184 = vmatprep.subr.mxu0 0.0
    %185 = vmatpush1.msra.mxu0 0.0
    %186 = vmatprep.subr.mxu0 0.0
    %187 = vmatpush1.msra.mxu0 0.0
    %188 = vmatprep.subr.mxu0 0.0
    %189 = vmatpush1.msra.mxu0 0.0
    %190 = vmatprep.subr.mxu0 0.0
    %191 = vmatpush1.msra.mxu0 0.0
    %192 = vmatprep.subr.mxu0 0.0
    %193 = vmatpush1.msra.mxu0 0.0
    %194 = vmatprep.subr.mxu0 0.0
    %195 = vmatpush1.msra.mxu0 0.0
    %196 = vmatprep.subr.mxu0 0.0
    %197 = vmatpush1.msra.mxu0 0.0
    %198 = vmatprep.subr.mxu0 0.0
    %199 = vmatpush1.msra.mxu0 0.0
    %200 = vmatprep.subr.mxu0 0.0
    %201 = vmatpush1.msra.mxu0 0.0
    %202 = vmatprep.subr.mxu0 0.0
    %203 = vmatpush1.msra.mxu0 0.0
    %204 = vmatprep.subr.mxu0 0.0
    %205 = vmatpush1.msra.mxu0 0.0
    %206 = vmatprep.mubr.f32.mxu0 0.0
    %207 = vmatmul.mubr.f32.gmra.mrb[0].mxu0 %v109
    %v208 = vpop.f32.mrb[0].mxu0
    %v209 = vadd.f32 0.0, %v208
    %v210 = vpop.f32.mrb[0].mxu0
    %211 = vdwg.mxu0
    %212 = vmatprep.subr.mxu0 0.0
    %213 = vmatpush1.msra.mxu0 %v110
    %214 = vmatprep.subr.mxu0 0.0
    %215 = vmatpush1.msra.mxu0 %v111
    %216 = vmatprep.subr.mxu0 0.0
    %217 = vmatpush1.msra.mxu0 %v112
    %218 = vmatprep.subr.mxu0 0.0
    %219 = vmatpush1.msra.mxu0 %v113
    %220 = vmatprep.subr.mxu0 0.0
    %221 = vmatpush1.msra.mxu0 %v114
    %222 = vmatprep.subr.mxu0 0.0
    %223 = vmatpush1.msra.mxu0 %v115
    %224 = vmatprep.subr.mxu0 0.0
    %225 = vmatpush1.msra.mxu0 %v116
    %226 = vmatprep.subr.mxu0 0.0
    %227 = vmatpush1.msra.mxu0 %v117
    %228 = vmatprep.subr.mxu0 0.0
    %229 = vmatpush1.msra.mxu0 %v118
    %230 = vmatprep.subr.mxu0 0.0
    %231 = vmatpush1.msra.mxu0 %v119
    %232 = vmatprep.subr.mxu0 0.0
    %233 = vmatpush1.msra.mxu0 %v120
    %234 = vmatprep.subr.mxu0 0.0
    %235 = vmatpush1.msra.mxu0 %v121
    %236 = vmatprep.subr.mxu0 0.0
    %237 = vmatpush1.msra.mxu0 %v122
    %238 = vmatprep.subr.mxu0 0.0
    %239 = vmatpush1.msra.mxu0 %v123
    %240 = vmatprep.subr.mxu0 0.0
    %241 = vmatpush1.msra.mxu0 %v124
    %242 = vmatprep.subr.mxu0 0.0
    %243 = vmatpush1.msra.mxu0 %v125
    %244 = vmatprep.subr.mxu0 0.0
    %245 = vmatpush1.msra.mxu0 0.0
    %246 = vmatprep.subr.mxu0 0.0
    %247 = vmatpush1.msra.mxu0 0.0
    %248 = vmatprep.subr.mxu0 0.0
    %249 = vmatpush1.msra.mxu0 0.0
    %250 = vmatprep.subr.mxu0 0.0
    %251 = vmatpush1.msra.mxu0 0.0
    %252 = vmatprep.subr.mxu0 0.0
    %253 = vmatpush1.msra.mxu0 0.0
    %254 = vmatprep.subr.mxu0 0.0
    %255 = vmatpush1.msra.mxu0 0.0
    %256 = vmatprep.subr.mxu0 0.0
    %257 = vmatpush1.msra.mxu0 0.0
    %258 = vmatprep.subr.mxu0 0.0
    %259 = vmatpush1.msra.mxu0 0.0
    %260 = vmatprep.subr.mxu0 0.0
    %261 = vmatpush1.msra.mxu0 0.0
    %262 = vmatprep.subr.mxu0 0.0
    %263 = vmatpush1.msra.mxu0 0.0
    %264 = vmatprep.subr.mxu0 0.0
    %265 = vmatpush1.msra.mxu0 0.0
    %266 = vmatprep.subr.mxu0 0.0
    %267 = vmatpush1.msra.mxu0 0.0
    %268 = vmatprep.subr.mxu0 0.0
    %269 = vmatpush1.msra.mxu0 0.0
    %270 = vmatprep.subr.mxu0 0.0
    %271 = vmatpush1.msra.mxu0 0.0
    %272 = vmatprep.subr.mxu0 0.0
    %273 = vmatpush1.msra.mxu0 0.0
    %274 = vmatprep.subr.mxu0 0.0
    %275 = vmatpush1.msra.mxu0 0.0
    %276 = vmatprep.mubr.f32.mxu0 0.0
    %277 = vmatmul.mubr.f32.gmra.mrb[0].mxu0 %v108
    %v278 = vpop.f32.mrb[0].mxu0
    %v279 = vadd.f32 %v209, %v278
    %v280 = vpop.f32.mrb[0].mxu0
    %281 = vdwg.mxu0
    %v282 = vld [vmem:[%s6] sm:$0x1]
    %v284 = vlaneseq
    %v285 = vshrl.u32 %v284, 7
    %v286 = vsub.s32 0, %v285
    %v287 = vrot.slane %v282, %v286
    %v289 = vadd.f32 %v279, %v287
    %v290 = vld [vmem:[#allocation10] sm:$0xff]
    %v291 = vld [vmem:[#allocation10 + $0x8] sm:$0xff]
    %v292 = vld [vmem:[#allocation10 + $0x10] sm:$0xff]
    %v293 = vld [vmem:[#allocation10 + $0x18] sm:$0xff]
    %v294 = vld [vmem:[#allocation10 + $0x20] sm:$0xff]
    %v295 = vld [vmem:[#allocation10 + $0x28] sm:$0xff]
    %v296 = vld [vmem:[#allocation10 + $0x30] sm:$0xff]
    %v297 = vld [vmem:[#allocation10 + $0x38] sm:$0xff]
    %v298 = vld [vmem:[#allocation10 + $0x40] sm:$0xff]
    %v299 = vld [vmem:[#allocation10 + $0x48] sm:$0xff]
    %v300 = vld [vmem:[#allocation10 + $0x50] sm:$0xff]
    %v301 = vld [vmem:[#allocation10 + $0x58] sm:$0xff]
    %v302 = vld [vmem:[#allocation10 + $0x60] sm:$0xff]
    %v303 = vld [vmem:[#allocation10 + $0x68] sm:$0xff]
    %v304 = vld [vmem:[#allocation10 + $0x70] sm:$0xff]
    %v305 = vld [vmem:[#allocation10 + $0x78] sm:$0xff]
    %v306 = vld [vmem:[#allocation11] sm:$0xff]
    %v307 = vld [vmem:[#allocation11 + $0x8] sm:$0xff]
    %v308 = vld [vmem:[#allocation11 + $0x10] sm:$0xff]
    %v309 = vld [vmem:[#allocation11 + $0x18] sm:$0xff]
    %v310 = vld [vmem:[#allocation11 + $0x20] sm:$0xff]
    %v311 = vld [vmem:[#allocation11 + $0x28] sm:$0xff]
    %v312 = vld [vmem:[#allocation11 + $0x30] sm:$0xff]
    %v313 = vld [vmem:[#allocation11 + $0x38] sm:$0xff]
    %v314 = vld [vmem:[#allocation11 + $0x40] sm:$0xff]
    %v315 = vld [vmem:[#allocation11 + $0x48] sm:$0xff]
    %v316 = vld [vmem:[#allocation11 + $0x50] sm:$0xff]
    %v317 = vld [vmem:[#allocation11 + $0x58] sm:$0xff]
    %v318 = vld [vmem:[#allocation11 + $0x60] sm:$0xff]
    %v319 = vld [vmem:[#allocation11 + $0x68] sm:$0xff]
    %v320 = vld [vmem:[#allocation11 + $0x70] sm:$0xff]
    %v321 = vld [vmem:[#allocation11 + $0x78] sm:$0xff]
    %322 = vmatprep.subr.mxu0 0.0
    %323 = vmatpush1.msra.mxu0 %v306
    %324 = vmatprep.subr.mxu0 0.0
    %325 = vmatpush1.msra.mxu0 %v307
    %326 = vmatprep.subr.mxu0 0.0
    %327 = vmatpush1.msra.mxu0 %v308
    %328 = vmatprep.subr.mxu0 0.0
    %329 = vmatpush1.msra.mxu0 %v309
    %330 = vmatprep.subr.mxu0 0.0
    %331 = vmatpush1.msra.mxu0 %v310
    %332 = vmatprep.subr.mxu0 0.0
    %333 = vmatpush1.msra.mxu0 %v311
    %334 = vmatprep.subr.mxu0 0.0
    %335 = vmatpush1.msra.mxu0 %v312
    %336 = vmatprep.subr.mxu0 0.0
    %337 = vmatpush1.msra.mxu0 %v313
    %338 = vmatprep.subr.mxu0 0.0
    %339 = vmatpush1.msra.mxu0 %v314
    %340 = vmatprep.subr.mxu0 0.0
    %341 = vmatpush1.msra.mxu0 %v315
    %342 = vmatprep.subr.mxu0 0.0
    %343 = vmatpush1.msra.mxu0 %v316
    %344 = vmatprep.subr.mxu0 0.0
    %345 = vmatpush1.msra.mxu0 %v317
    %346 = vmatprep.subr.mxu0 0.0
    %347 = vmatpush1.msra.mxu0 %v318
    %348 = vmatprep.subr.mxu0 0.0
    %349 = vmatpush1.msra.mxu0 %v319
    %350 = vmatprep.subr.mxu0 0.0
    %351 = vmatpush1.msra.mxu0 %v320
    %352 = vmatprep.subr.mxu0 0.0
    %353 = vmatpush1.msra.mxu0 %v321
    %354 = vmatprep.subr.mxu0 0.0
    %355 = vmatpush1.msra.mxu0 0.0
    %356 = vmatprep.subr.mxu0 0.0
    %357 = vmatpush1.msra.mxu0 0.0
    %358 = vmatprep.subr.mxu0 0.0
    %359 = vmatpush1.msra.mxu0 0.0
    %360 = vmatprep.subr.mxu0 0.0
    %361 = vmatpush1.msra.mxu0 0.0
    %362 = vmatprep.subr.mxu0 0.0
    %363 = vmatpush1.msra.mxu0 0.0
    %364 = vmatprep.subr.mxu0 0.0
    %365 = vmatpush1.msra.mxu0 0.0
    %366 = vmatprep.subr.mxu0 0.0
    %367 = vmatpush1.msra.mxu0 0.0
    %368 = vmatprep.subr.mxu0 0.0
    %369 = vmatpush1.msra.mxu0 0.0
    %370 = vmatprep.subr.mxu0 0.0
    %371 = vmatpush1.msra.mxu0 0.0
    %372 = vmatprep.subr.mxu0 0.0
    %373 = vmatpush1.msra.mxu0 0.0
    %374 = vmatprep.subr.mxu0 0.0
    %375 = vmatpush1.msra.mxu0 0.0
    %376 = vmatprep.subr.mxu0 0.0
    %377 = vmatpush1.msra.mxu0 0.0
    %378 = vmatprep.subr.mxu0 0.0
    %379 = vmatpush1.msra.mxu0 0.0
    %380 = vmatprep.subr.mxu0 0.0
    %381 = vmatpush1.msra.mxu0 0.0
    %382 = vmatprep.subr.mxu0 0.0
    %383 = vmatpush1.msra.mxu0 0.0
    %384 = vmatprep.subr.mxu0 0.0
    %385 = vmatpush1.msra.mxu0 0.0
    %386 = vmatprep.mubr.f32.mxu0 0.0
    %387 = vmatmul.mubr.f32.gmra.mrb[0].mxu0 %v109
    %v388 = vpop.f32.mrb[0].mxu0
    %v389 = vadd.f32 0.0, %v388
    %v390 = vpop.f32.mrb[0].mxu0
    %391 = vdwg.mxu0
    %392 = vmatprep.subr.mxu0 0.0
    %393 = vmatpush1.msra.mxu0 %v290
    %394 = vmatprep.subr.mxu0 0.0
    %395 = vmatpush1.msra.mxu0 %v291
    %396 = vmatprep.subr.mxu0 0.0
    %397 = vmatpush1.msra.mxu0 %v292
    %398 = vmatprep.subr.mxu0 0.0
    %399 = vmatpush1.msra.mxu0 %v293
    %400 = vmatprep.subr.mxu0 0.0
    %401 = vmatpush1.msra.mxu0 %v294
    %402 = vmatprep.subr.mxu0 0.0
    %403 = vmatpush1.msra.mxu0 %v295
    %404 = vmatprep.subr.mxu0 0.0
    %405 = vmatpush1.msra.mxu0 %v296
    %406 = vmatprep.subr.mxu0 0.0
    %407 = vmatpush1.msra.mxu0 %v297
    %408 = vmatprep.subr.mxu0 0.0
    %409 = vmatpush1.msra.mxu0 %v298
    %410 = vmatprep.subr.mxu0 0.0
    %411 = vmatpush1.msra.mxu0 %v299
    %412 = vmatprep.subr.mxu0 0.0
    %413 = vmatpush1.msra.mxu0 %v300
    %414 = vmatprep.subr.mxu0 0.0
    %415 = vmatpush1.msra.mxu0 %v301
    %416 = vmatprep.subr.mxu0 0.0
    %417 = vmatpush1.msra.mxu0 %v302
    %418 = vmatprep.subr.mxu0 0.0
    %419 = vmatpush1.msra.mxu0 %v303
    %420 = vmatprep.subr.mxu0 0.0
    %421 = vmatpush1.msra.mxu0 %v304
    %422 = vmatprep.subr.mxu0 0.0
    %423 = vmatpush1.msra.mxu0 %v305
    %424 = vmatprep.subr.mxu0 0.0
    %425 = vmatpush1.msra.mxu0 0.0
    %426 = vmatprep.subr.mxu0 0.0
    %427 = vmatpush1.msra.mxu0 0.0
    %428 = vmatprep.subr.mxu0 0.0
    %429 = vmatpush1.msra.mxu0 0.0
    %430 = vmatprep.subr.mxu0 0.0
    %431 = vmatpush1.msra.mxu0 0.0
    %432 = vmatprep.subr.mxu0 0.0
    %433 = vmatpush1.msra.mxu0 0.0
    %434 = vmatprep.subr.mxu0 0.0
    %435 = vmatpush1.msra.mxu0 0.0
    %436 = vmatprep.subr.mxu0 0.0
    %437 = vmatpush1.msra.mxu0 0.0
    %438 = vmatprep.subr.mxu0 0.0
    %439 = vmatpush1.msra.mxu0 0.0
    %440 = vmatprep.subr.mxu0 0.0
    %441 = vmatpush1.msra.mxu0 0.0
    %442 = vmatprep.subr.mxu0 0.0
    %443 = vmatpush1.msra.mxu0 0.0
    %444 = vmatprep.subr.mxu0 0.0
    %445 = vmatpush1.msra.mxu0 0.0
    %446 = vmatprep.subr.mxu0 0.0
    %447 = vmatpush1.msra.mxu0 0.0
    %448 = vmatprep.subr.mxu0 0.0
    %449 = vmatpush1.msra.mxu0 0.0
    %450 = vmatprep.subr.mxu0 0.0
    %451 = vmatpush1.msra.mxu0 0.0
    %452 = vmatprep.subr.mxu0 0.0
    %453 = vmatpush1.msra.mxu0 0.0
    %454 = vmatprep.subr.mxu0 0.0
    %455 = vmatpush1.msra.mxu0 0.0
    %456 = vmatprep.mubr.f32.mxu0 0.0
    %457 = vmatmul.mubr.f32.gmra.mrb[0].mxu0 %v108
    %v458 = vpop.f32.mrb[0].mxu0
    %v459 = vadd.f32 %v389, %v458
    %v460 = vpop.f32.mrb[0].mxu0
    %461 = vdwg.mxu0
    %v462 = vld [vmem:[%s7] sm:$0x1]
    %v464 = vlaneseq
    %v465 = vshrl.u32 %v464, 7
    %v466 = vsub.s32 0, %v465
    %v467 = vrot.slane %v462, %v466
    %v469 = vadd.f32 %v459, %v467
    %v470 = vxor.u32 %v289, 2147483648
    %v471 = vmul.f32 %v470, 1.442695
    %v472 = vpow.pop %v471
    %v473 = vadd.f32 %v472, 1.0
    %v474 = vrcp.pop %v473
    %v475 = vmul.f32 1.0, %v474
    %v476 = vtanh.pop %v469
    %v477 = vmul.f32 %v475, %v476
    %478 = vst [vmem:[#allocation13] sm:$0xf] %v477
    // Predicated region
    $region58: #{tpu_custom_call.1} parent=1 // pred_check
      _
    $region59: #{tpu_custom_call.1} parent=1 // pred_check_branch
      %480 = sbr.rel (0) target = $region61
    $region60: #{tpu_custom_call.1} parent=1 // pred_region
      %s482 = ssub.s32 64, 64
      %483 = vsyncadd [#allocation4], %s482
      %s485 = sshll.u32 [#allocation13], 4
      %s486 = int_to_ptr.vmem [resolvable:$true] %s485
      %488 = dma.vmem_to_hbm [thread:$0]  %s486, 64, %s8, [#allocation4]
    $region61: #{tpu_custom_call.1} parent=1 // pred_fallthru
      _
    // Predicated region
    $region62: #{tpu_custom_call.1} parent=1 // pred_check
      _
    $region63: #{tpu_custom_call.1} parent=1 // pred_check_branch
      %490 = sbr.rel (0) target = $region65
    $region64: #{tpu_custom_call.1} parent=1 // pred_region
      %491 = dma.done [#allocation4], 64
    $region65: #{tpu_custom_call.1} parent=1 // pred_fallthru
      _
    %492 = vsyncpa [#allocation3], 1
    %493 = vsyncpa [#allocation6], 1
    %494 = vsyncpa [#allocation9], 1
    %495 = vsyncpa [#allocation12], 1
    %496 = vsyncpa [#allocation4], 1

</llo_original>
